<compile_context>
chip_gen: v7x
topology: tpu7x:2x2x1
jax: 0.10.0
libtpu: 0.0.40
codegen_flags: <defaults>
</compile_context>

<pallas_src>
import functools

import jax
import jax.numpy as jnp
from jax.experimental import pallas as pl
from jax.experimental.pallas import tpu as pltpu


def _concat_pool_kernel(x_ref, out_ref, max_acc, sum_acc, *,
                        inv_hw, hw, hw_tile, mask_hw):
    k = pl.program_id(1)
    x = x_ref[...]

    if mask_hw:
        # The last hw block overhangs the array: mask the garbage lanes.
        lane = jax.lax.broadcasted_iota(jnp.int32, x.shape, dimension=1)
        valid = (k * hw_tile + lane) < hw
        if jnp.issubdtype(x.dtype, jnp.floating):
            fill_min = jnp.array(-jnp.inf, dtype=x.dtype)
        else:
            fill_min = jnp.array(jnp.iinfo(x.dtype).min, dtype=x.dtype)
        x_max_in = jnp.where(valid, x, fill_min)
        x_sum_in = jnp.where(valid, x, jnp.zeros((), dtype=x.dtype))
    else:
        x_max_in = x
        x_sum_in = x

    # Max in the input's native dtype; cast only the skinny (row_tile, 1) result.
    blk_max = jnp.max(x_max_in, axis=-1, keepdims=True).astype(jnp.float32)
    # The sum path is the only place the block is widened to f32.
    blk_sum = jnp.sum(x_sum_in.astype(jnp.float32), axis=-1, keepdims=True)

    @pl.when(k == 0)
    def _():
        max_acc[...] = jnp.full_like(max_acc, -jnp.inf)
        sum_acc[...] = jnp.zeros_like(sum_acc)

    max_acc[...] = jnp.maximum(max_acc[...], blk_max)
    sum_acc[...] = sum_acc[...] + blk_sum

    @pl.when(k == pl.num_programs(1) - 1)
    def _():
        # Single fused store: lane 0 = max, lane 1 = mean (divide replaced by
        # a hoisted trace-time reciprocal multiply).
        lane2 = jax.lax.broadcasted_iota(jnp.int32, out_ref.shape, 1)
        fused = jnp.where(lane2 == 0, max_acc[...], sum_acc[...] * inv_hw)
        out_ref[...] = fused.astype(out_ref.dtype)


def _round_up(a, m):
    return ((a + m - 1) // m) * m


def _tpu_vmem_and_cores():
    """Best-effort chip query; conservative defaults when unavailable."""
    vmem_bytes = 64 * 1024 * 1024   # smallest per-core VMEM across v5e/v6e/v7x
    num_cores = 1                   # v5e/v6e: single TensorCore
    try:
        info = pltpu.get_tpu_info()
        v = getattr(info, "vmem_capacity_bytes", None)
        if isinstance(v, int) and v > 0:
            vmem_bytes = v
        for attr in ("num_tensorcores", "tensorcore_count", "num_cores",
                     "core_count"):
            c = getattr(info, attr, None)
            if isinstance(c, int) and c > 0:
                num_cores = c
                break
    except Exception:
        pass
    return vmem_bytes, num_cores


def _choose_tiles(rows, hw, itemsize, target_block_bytes, num_cores):
    """Pick (row_tile, hw_tile) so the PADDED input block stays within the
    per-chip byte budget, with dtype-aware sublane granularity."""
    min_sub = {4: 8, 2: 16, 1: 32}.get(itemsize, 8)
    hw_pad = _round_up(hw, 128)

    # Largest legal row tile: a multiple of the sublane granule (<= rows), or
    # the whole row count when rows is smaller than one granule (== full dim).
    if rows <= min_sub:
        row_tile_max = rows
    else:
        row_tile_max = (rows // min_sub) * min_sub

    if min_sub * hw_pad * itemsize <= target_block_bytes:
        # Whole row fits: single reduction step; grow row tile to the budget.
        hw_tile = hw
        budget_rows = max(min_sub,
                          (target_block_bytes // (hw_pad * itemsize))
                          // min_sub * min_sub)
        row_tile = min(row_tile_max, budget_rows)
        # Split rows across TensorCores only when the chip actually has more
        # than one; aim for >= 2 row blocks per core so each core keeps a
        # double-buffered pipeline.  Single-core chips keep the big tile.
        if num_cores > 1 and rows > 2 * num_cores * min_sub:
            per_block = _round_up(pl.cdiv(rows, 2 * num_cores), min_sub)
            row_tile = max(min_sub, min(row_tile, per_block))
    else:
        # Huge feature map: tile the reduction axis too.  ~128 rows per block
        # amortizes accumulator init/finalize and output stores; hw tile is a
        # multiple of 128 within the budget and MAY overhang hw (the kernel
        # masks the overhanging lanes), so no exact-divisor requirement.
        row_tile = min(row_tile_max, 128)
        rpad = _round_up(max(row_tile, 1), min_sub)
        hw_budget = (target_block_bytes // (rpad * itemsize)) // 128 * 128
        hw_tile = int(min(hw_pad, max(128, hw_budget)))
    return row_tile, hw_tile, min_sub


def adaptive_concat_pool2d(x, row_tile=None, hw_tile=None):
    """x: (N, C, H, W) -> (N, 2*C, 1, 1); first C channels = max, next C = avg."""
    N, C, H, W = x.shape
    rows = N * C
    hw = H * W
    itemsize = jnp.dtype(x.dtype).itemsize

    vmem_cap, num_cores = _tpu_vmem_and_cores()
    # ~4 MiB blocks on 64 MiB-VMEM chips (v7x), ~8 MiB on 128 MiB (v5e/v6e);
    # the pipeline double-buffers each block.
    target_block_bytes = (4 << 20) if vmem_cap <= (64 << 20) else (8 << 20)

    auto_rt, auto_ht, min_sub = _choose_tiles(rows, hw, itemsize,
                                              target_block_bytes, num_cores)
    row_tile = auto_rt if row_tile is None else int(row_tile)
    hw_tile = auto_ht if hw_tile is None else int(hw_tile)
    if hw_tile != hw and hw_tile % 128 != 0:
        raise ValueError("hw_tile must equal H*W or be a multiple of 128")

    # Last hw block overhangs the array -> mask the garbage lanes in-kernel.
    mask_hw = (hw % hw_tile) != 0

    x2d = x.reshape(rows, hw)   # no input padding; overhangs handled by masks
    grid = (pl.cdiv(rows, row_tile), pl.cdiv(hw, hw_tile))

    # VMEM budget from PADDED footprints (lanes -> 128, sublanes -> granule).
    rpad = _round_up(row_tile, min_sub)
    in_block = rpad * _round_up(hw_tile, 128) * itemsize
    out_block = rpad * 128 * itemsize
    scratch = 2 * _round_up(row_tile, 8) * 128 * 4
    need = 2 * in_block + 2 * out_block + scratch + (4 << 20)
    vmem_limit = int(min(vmem_cap, max(32 << 20, need)))

    kernel = functools.partial(_concat_pool_kernel,
                               inv_hw=float(1.0 / hw), hw=hw,
                               hw_tile=hw_tile, mask_hw=mask_hw)

    out2 = pl.pallas_call(
        kernel,
        out_shape=jax.ShapeDtypeStruct((rows, 2), x.dtype),
        grid_spec=pltpu.PrefetchScalarGridSpec(
            num_scalar_prefetch=0,
            grid=grid,
            in_specs=[pl.BlockSpec((row_tile, hw_tile), lambda i, k: (i, k))],
            out_specs=pl.BlockSpec((row_tile, 2), lambda i, k: (i, 0)),
            scratch_shapes=[
                pltpu.VMEM((row_tile, 1), jnp.float32),  # running max
                pltpu.VMEM((row_tile, 1), jnp.float32),  # running sum
            ],
        ),
        compiler_params=pltpu.CompilerParams(
            dimension_semantics=("parallel", "arbitrary"),
            vmem_limit_bytes=vmem_limit,
        ),
        cost_estimate=pl.CostEstimate(
            flops=2 * rows * hw,
            transcendentals=0,
            bytes_accessed=rows * hw * itemsize + rows * 2 * itemsize,
        ),
    )(x2d)

    mx = out2[:, 0].reshape(N, C, 1, 1)
    av = out2[:, 1].reshape(N, C, 1, 1)
    # torch.cat([mp(x), ap(x)], 1): max channels first, then avg.
    # Note: for integer inputs the mean is truncated by the final cast (fp
    # inputs, the normal case, match PyTorch to ~1 ulp).
    return jnp.concatenate([mx, av], axis=1)


def _reference(x):
    xf = x.astype(jnp.float32)
    mx = jnp.max(xf, axis=(2, 3), keepdims=True)
    av = jnp.mean(xf, axis=(2, 3), keepdims=True)
    return jnp.concatenate([mx, av], axis=1).astype(x.dtype)


if __name__ == "__main__":
    root = jax.random.PRNGKey(0)
    k1, k2, k3, k4 = jax.random.split(root, 4)

    # 1) Base case (f32, single reduction step, exact row block).
    x = jax.random.normal(k1, (2, 4, 16, 16), dtype=jnp.float32)
    out = jax.block_until_ready(adaptive_concat_pool2d(x))
    assert out.shape == (2, 8, 1, 1), out.shape
    assert jnp.allclose(out, _reference(x), atol=1e-5, rtol=1e-5)

    # 2) Rows not a multiple of the row tile (overhanging row block, no padding).
    x2 = jax.random.normal(k2, (3, 5, 16, 24), dtype=jnp.float32)
    out2 = jax.block_until_ready(adaptive_concat_pool2d(x2, row_tile=8))
    assert out2.shape == (3, 10, 1, 1), out2.shape
    assert jnp.allclose(out2, _reference(x2), atol=1e-5, rtol=1e-5)

    # 3) Tiled reduction axis with overhanging, in-kernel-masked lanes
    #    (hw = 14*14 = 196, tile 128 -> last block masks 60 garbage lanes).
    x3 = jax.random.normal(k3, (2, 4, 14, 14), dtype=jnp.float32)
    out3 = jax.block_until_ready(adaptive_concat_pool2d(x3, hw_tile=128))
    assert jnp.allclose(out3, _reference(x3), atol=1e-5, rtol=1e-5)

    # 4) Small odd hw that is not a multiple of 128 (full-row block, no mask).
    x4 = jax.random.normal(k4, (2, 4, 7, 7), dtype=jnp.float32)
    out4 = jax.block_until_ready(adaptive_concat_pool2d(x4))
    assert jnp.allclose(out4, _reference(x4), atol=1e-5, rtol=1e-5)

    # 5) bf16 input (native-dtype max path; f32 accumulation for the mean).
    xb = jax.random.normal(k2, (2, 4, 16, 16), dtype=jnp.bfloat16)
    outb = jax.block_until_ready(adaptive_concat_pool2d(xb))
    assert outb.dtype == jnp.bfloat16
    assert jnp.allclose(outb.astype(jnp.float32),
                        _reference(xb).astype(jnp.float32),
                        atol=2e-2, rtol=2e-2)

    print("KERNEL_OK")
</pallas_src>

<mosaic_0001>
module attributes {stable_mosaic.version = 11 : i64} {
  func.func @_concat_pool_kernel(%arg0: i32, %arg1: i32, %arg2: memref<8x256xf32, #tpu.memory_space<vmem>>, %arg3: memref<8x2xf32, #tpu.memory_space<vmem>>, %arg4: memref<8x1xf32, #tpu.memory_space<vmem>>, %arg5: memref<8x1xf32, #tpu.memory_space<vmem>>) attributes {dimension_semantics = [#tpu.dimension_semantics<parallel>, #tpu.dimension_semantics<arbitrary>], iteration_bounds = array<i64: 1, 1>, scalar_prefetch = 0 : i64, scratch_operands = 2 : i64, tpu.core_type = #tpu.core_type<tc>, window_params = [{transform_indices = @transform_0, window_bounds = array<i64: 8, 256>}, {transform_indices = @transform_1, window_bounds = array<i64: 8, 2>}]} {
    %c0 = arith.constant 0 : index
    %c0_0 = arith.constant 0 : index
    %0 = vector.load %arg2[%c0, %c0_0] : memref<8x256xf32, #tpu.memory_space<vmem>>, vector<8x256xf32>
    %cst = arith.constant dense<0xFF800000> : vector<8xf32>
    %1 = vector.multi_reduction <maximumf>, %0, %cst [1] : vector<8x256xf32> to vector<8xf32>
    %2 = vector.shape_cast %1 : vector<8xf32> to vector<8x1xf32>
    %cst_1 = arith.constant dense<0.000000e+00> : vector<8xf32>
    %3 = vector.multi_reduction <add>, %0, %cst_1 [1] : vector<8x256xf32> to vector<8xf32>
    %4 = vector.shape_cast %3 : vector<8xf32> to vector<8x1xf32>
    %c0_i32 = arith.constant 0 : i32
    %5 = arith.cmpi eq, %arg1, %c0_i32 : i32
    %6 = arith.extui %5 : i1 to i32
    %c0_i32_2 = arith.constant 0 : i32
    %7 = arith.cmpi ne, %6, %c0_i32_2 : i32
    scf.if %7 {
      %cst_13 = arith.constant 0xFF800000 : f32
      %17 = vector.broadcast %cst_13 : f32 to vector<8x1xf32>
      %c0_14 = arith.constant 0 : index
      %c0_15 = arith.constant 0 : index
      %18 = vector.load %arg4[%c0_14, %c0_15] : memref<8x1xf32, #tpu.memory_space<vmem>>, vector<8x1xf32>
      tpu.vector_store %arg4[%c0_14, %c0_15], %17 {strides = array<i32>} : memref<8x1xf32, #tpu.memory_space<vmem>>, vector<8x1xf32>,
      %cst_16 = arith.constant 0.000000e+00 : f32
      %19 = vector.broadcast %cst_16 : f32 to vector<8x1xf32>
      %c0_17 = arith.constant 0 : index
      %c0_18 = arith.constant 0 : index
      %20 = vector.load %arg5[%c0_17, %c0_18] : memref<8x1xf32, #tpu.memory_space<vmem>>, vector<8x1xf32>
      tpu.vector_store %arg5[%c0_17, %c0_18], %19 {strides = array<i32>} : memref<8x1xf32, #tpu.memory_space<vmem>>, vector<8x1xf32>,
    } else {
    }
    %c0_3 = arith.constant 0 : index
    %c0_4 = arith.constant 0 : index
    %8 = vector.load %arg4[%c0_3, %c0_4] : memref<8x1xf32, #tpu.memory_space<vmem>>, vector<8x1xf32>
    %9 = arith.maximumf %8, %2 : vector<8x1xf32>
    %c0_5 = arith.constant 0 : index
    %c0_6 = arith.constant 0 : index
    %10 = vector.load %arg4[%c0_5, %c0_6] : memref<8x1xf32, #tpu.memory_space<vmem>>, vector<8x1xf32>
    tpu.vector_store %arg4[%c0_5, %c0_6], %9 {strides = array<i32>} : memref<8x1xf32, #tpu.memory_space<vmem>>, vector<8x1xf32>,
    %c0_7 = arith.constant 0 : index
    %c0_8 = arith.constant 0 : index
    %11 = vector.load %arg5[%c0_7, %c0_8] : memref<8x1xf32, #tpu.memory_space<vmem>>, vector<8x1xf32>
    %12 = arith.addf %11, %4 : vector<8x1xf32>
    %c0_9 = arith.constant 0 : index
    %c0_10 = arith.constant 0 : index
    %13 = vector.load %arg5[%c0_9, %c0_10] : memref<8x1xf32, #tpu.memory_space<vmem>>, vector<8x1xf32>
    tpu.vector_store %arg5[%c0_9, %c0_10], %12 {strides = array<i32>} : memref<8x1xf32, #tpu.memory_space<vmem>>, vector<8x1xf32>,
    %c0_i32_11 = arith.constant 0 : i32
    %14 = arith.cmpi eq, %arg1, %c0_i32_11 : i32
    %15 = arith.extui %14 : i1 to i32
    %c0_i32_12 = arith.constant 0 : i32
    %16 = arith.cmpi ne, %15, %c0_i32_12 : i32
    scf.if %16 {
      %17 = tpu.iota {dimensions = array<i32: 1>} : vector<8x2xi32>
      %c0_i32_13 = arith.constant 0 : i32
      %18 = vector.broadcast %c0_i32_13 : i32 to vector<8x2xi32>
      %19 = arith.cmpi eq, %17, %18 : vector<8x2xi32>
      %c0_14 = arith.constant 0 : index
      %c0_15 = arith.constant 0 : index
      %20 = vector.load %arg4[%c0_14, %c0_15] : memref<8x1xf32, #tpu.memory_space<vmem>>, vector<8x1xf32>
      %c0_16 = arith.constant 0 : index
      %c0_17 = arith.constant 0 : index
      %21 = vector.load %arg5[%c0_16, %c0_17] : memref<8x1xf32, #tpu.memory_space<vmem>>, vector<8x1xf32>
      %cst_18 = arith.constant 3.906250e-03 : f32
      %22 = vector.broadcast %cst_18 : f32 to vector<8x1xf32>
      %23 = arith.mulf %21, %22 : vector<8x1xf32>
      %24 = vector.shape_cast %20 : vector<8x1xf32> to vector<8x1xf32>
      %25 = vector.broadcast %24 : vector<8x1xf32> to vector<8x2xf32>
      %26 = vector.shape_cast %23 : vector<8x1xf32> to vector<8x1xf32>
      %27 = vector.broadcast %26 : vector<8x1xf32> to vector<8x2xf32>
      %28 = arith.select %19, %25, %27 : vector<8x2xi1>, vector<8x2xf32>
      %c0_19 = arith.constant 0 : index
      %c0_20 = arith.constant 0 : index
      %29 = vector.load %arg3[%c0_19, %c0_20] : memref<8x2xf32, #tpu.memory_space<vmem>>, vector<8x2xf32>
      tpu.vector_store %arg3[%c0_19, %c0_20], %28 {strides = array<i32>} : memref<8x2xf32, #tpu.memory_space<vmem>>, vector<8x2xf32>,
    } else {
    }
    return
  }
  func.func @transform_0(%arg0: i32, %arg1: i32) -> (i32, i32) {
    %c0_i32 = arith.constant 0 : i32
    return %arg0, %arg1 : i32, i32
  }
  func.func @transform_1(%arg0: i32, %arg1: i32) -> (i32, i32) {
    %c0_i32 = arith.constant 0 : i32
    %c0_i32_0 = arith.constant 0 : i32
    return %arg0, %c0_i32 : i32, i32
  }
}

</mosaic_0001>

<llo_original>
// kernel: tpu_custom_call.1
$region0: #{tpu_custom_call.1}
  #allocation0 [shape = 'u32[]', space=smem, size = 0x4, offset = 0x4, fixed_abs, tag = 'smem constant byte address 0x4 - core index']
  #allocation1 [shape = 'u32[144,128]{1,0:T(1,128)}', space=vmem, size = 0x12000, scoped, tag = 'internal scratch']
  #allocation2 [shape = 'f32[8,1]{1,0:T(8,128)}', space=vmem, size = 0x1000, scoped, tag = 'scratch operand']
  #allocation3 [shape = 'f32[8,1]{1,0:T(8,128)}', space=vmem, size = 0x1000, scoped, tag = 'scratch operand']
  %s0 = inlined_call_operand.hbm [shape: f32[8,256], index: 0, kind: input, shape index: {}]
  %s1 = inlined_call_operand.vmem [shape: f32[8,2], index: 1, kind: output, shape index: {}]
  %s2 = sld [smem:[#allocation0]]
  $region26: #{tpu_custom_call.1} parent=0
    _
  %s4 = ssub.s32 1, %s2
  %s5 = scalar_select 0, %s4, %s2
  $region1: #{tpu_custom_call.1} parent=0
    #allocation4 [shape = 'u8[8192]{0}', space=vmem, size = 0x2000, scoped, tag = 'input window, operand 0, single buffered']
    #allocation5 [shape = 's32[1]{0}', space=sflag, size = 0x4, scoped, tag = 'scoped memory for tpu_custom_call.1']
    %6 = vsyncpa [#allocation5], 0
    // Predicated region
    $region2: #{tpu_custom_call.1} parent=1 // pred_check
      _
    $region3: #{tpu_custom_call.1} parent=1 // pred_check_branch
      %8 = sbr.rel (0) target = $region5
    $region4: #{tpu_custom_call.1} parent=1 // pred_region
      %s10 = ssub.s32 256, 256
      %11 = vsyncadd [#allocation5], %s10
      %s13 = sshll.u32 [#allocation4], 4
      %s14 = int_to_ptr.vmem [resolvable:$true] %s13
      %16 = dma.hbm_to_vmem [thread:$0]  %s0, 256, %s14, [#allocation5]
    $region5: #{tpu_custom_call.1} parent=1 // pred_fallthru
      _
    // Predicated region
    $region6: #{tpu_custom_call.1} parent=1 // pred_check
      _
    $region7: #{tpu_custom_call.1} parent=1 // pred_check_branch
      %18 = sbr.rel (0) target = $region9
    $region8: #{tpu_custom_call.1} parent=1 // pred_region
      %19 = dma.done [#allocation5], 256
    $region9: #{tpu_custom_call.1} parent=1 // pred_fallthru
      _
    %v20 = vld [vmem:[#allocation4] sm:$0xff]
    %v21 = vld [vmem:[#allocation4 + $0x8] sm:$0xff]
    %v22 = vmax.f32 %v20, %v21
    %23 = vmax.xlane.f32.xlu0 %v22
    %v24 = vpop.xlane.xlu0 %23
    %v25 = vadd.f32 %v20, %v21
    %26 = vadd.xlane.f32.xlu0 %v25
    %v27 = vpop.xlane.xlu0 %26
    %p28 = scmp.eq.s32.totalorder 0, 0
    // Predicated region
    $region10: #{tpu_custom_call.1} parent=1 // pred_check
      %p29 = pneg %p28
    $region11: #{tpu_custom_call.1} parent=1 // pred_check_branch
      %31 = sbr.rel (%p29) target = $region13
    $region12: #{tpu_custom_call.1} parent=1 // pred_region
      %vm32 = vcmask 7168
      %33 = vst.msk [vmem:[#allocation2] sm:$0xff] %vm32, -inf
      %34 = vst.msk [vmem:[#allocation3] sm:$0xff] %vm32, 0.0
    $region13: #{tpu_custom_call.1} parent=1 // pred_fallthru
      _
    %v35 = vld [vmem:[#allocation2] sm:$0xff]
    %v36 = vmax.f32 %v35, %v24
    %vm37 = vcmask 7168
    %38 = vst.msk [vmem:[#allocation2] sm:$0xff] %vm37, %v36
    %v39 = vld [vmem:[#allocation3] sm:$0xff]
    %v40 = vadd.f32 %v39, %v27
    %41 = vst.msk [vmem:[#allocation3] sm:$0xff] %vm37, %v40
    // Predicated region
    $region14: #{tpu_custom_call.1} parent=1 // pred_check
      %p42 = pneg %p28
    $region15: #{tpu_custom_call.1} parent=1 // pred_check_branch
      %44 = sbr.rel (%p42) target = $region17
    $region16: #{tpu_custom_call.1} parent=1 // pred_region
      %v45 = vlaneseq
      %v46 = vand.u32 %v45, 127
      %vm47 = vcmp.eq.s32.totalorder %v46, 0
      %v48 = vld [vmem:[#allocation2] sm:$0xff]
      %v49 = vld [vmem:[#allocation3] sm:$0xff]
      %v50 = vmul.f32 %v49, 0.00390625
      %52 = vset.pattern.permute.xlu0 0
      %53 = vperm.xlu0 %52, %v48
      %v54 = vpop.permute.xlu0 %53
      %57 = vset.pattern.permute.xlu0 0
      %58 = vperm.xlu0 %57, %v50
      %v59 = vpop.permute.xlu0 %58
      %v61 = vsel %vm47, %v54, %v59
      %vm62 = vcmask 15360
      %63 = vst.msk [vmem:[%s1] sm:$0xff] %vm62, %v61
    $region17: #{tpu_custom_call.1} parent=1 // pred_fallthru
      _
    // Predicated region
    $region18: #{tpu_custom_call.1} parent=1 // pred_check
      _
    $region19: #{tpu_custom_call.1} parent=1 // pred_check_branch
      %65 = sbr.rel (0) target = $region21
    $region20: #{tpu_custom_call.1} parent=1 // pred_region
      _
    $region21: #{tpu_custom_call.1} parent=1 // pred_fallthru
      _
    // Predicated region
    $region22: #{tpu_custom_call.1} parent=1 // pred_check
      _
    $region23: #{tpu_custom_call.1} parent=1 // pred_check_branch
      %67 = sbr.rel (0) target = $region25
    $region24: #{tpu_custom_call.1} parent=1 // pred_region
      _
    $region25: #{tpu_custom_call.1} parent=1 // pred_fallthru
      _
    %68 = vsyncpa [#allocation5], 1

</llo_original>
